<compile_context>
chip_gen: v6e
topology: v6e:2x2x1
jax: 0.10.0
libtpu: 0.0.40
codegen_flags: <defaults>
</compile_context>

<pallas_src>
import jax
import jax.numpy as jnp
from jax.experimental import pallas as pl
from jax.experimental.pallas import tpu as pltpu

GAMMA = 1.5
ALPHA = 0.25

LANES = 128      # vreg lane width (last dim of every block)
BR_MAX = 2048    # rows per block: ~1 MiB f32 per input per pipeline buffer
NCORES = 2       # leading "parallel" grid axis (2 TensorCores on v7x)


def _make_focal_kernel(total, br, steps_per_core, gamma, alpha):
    sub = br // 8  # number of (8, 128) sub-tiles per block

    def kernel(pred_ref, true_ref, out_ref):
        c = pl.program_id(0)
        i = pl.program_id(1)

        x = pred_ref[...].astype(jnp.float32)
        y = true_ref[...].astype(jnp.float32)

        # One exp per element, shared by the softplus and the sigmoid.
        e = jnp.exp(-jnp.abs(x))
        # BCEWithLogitsLoss (reduction='none'), numerically stable form:
        #   bce = max(x, 0) - x*y + log(1 + exp(-|x|))
        bce = jnp.maximum(x, 0.0) - x * y + jnp.log1p(e)

        # sigmoid(x) derived from the same exp(-|x|).
        inv = 1.0 / (1.0 + e)                      # sigmoid(|x|)
        p = jnp.where(x >= 0.0, inv, e * inv)      # sigmoid(x)

        p_t = y * p + (1.0 - y) * (1.0 - p)
        alpha_factor = y * alpha + (1.0 - y) * (1.0 - alpha)
        t = jnp.maximum(1.0 - p_t, 0.0)            # clamp: avoids NaN from rounding
        if gamma == 1.5:
            mod = t * jnp.sqrt(t)                  # t**1.5 without the exp/log pow pair
        else:
            mod = t ** gamma
        loss = bce * alpha_factor * mod

        # Mask out padded elements (flattened index >= total).
        row0 = (c * steps_per_core + i) * br
        rows_idx = jax.lax.broadcasted_iota(jnp.int32, (br, LANES), 0) + row0
        lane_idx = jax.lax.broadcasted_iota(jnp.int32, (br, LANES), 1)
        flat_idx = rows_idx * LANES + lane_idx
        loss = jnp.where(flat_idx < total, loss, 0.0)

        # Per-(sublane, lane) partial sums: pure VPU adds, no cross-lane XLU.
        partial = jnp.sum(loss.reshape(sub, 8, LANES), axis=0)

        @pl.when(i == 0)
        def _():
            out_ref[...] = jnp.zeros_like(out_ref)

        out_ref[...] += partial

    return kernel


def focal_loss(pred, true, gamma=GAMMA, alpha=ALPHA):
    """Mean focal loss over BCEWithLogits (YOLOv5 usage). Any input shape/dtype."""
    assert pred.shape == true.shape
    total = int(pred.size)

    rows = -(-total // LANES)                                   # ceil
    rows_per_core = -(-rows // NCORES)
    br = min(BR_MAX, ((rows_per_core + 15) // 16) * 16)         # mult. of 16 (bf16-safe)
    steps_per_core = -(-rows_per_core // br)
    rows_padded = NCORES * steps_per_core * br
    padded_total = rows_padded * LANES

    pred_flat = jnp.ravel(pred)
    true_flat = jnp.ravel(true)
    if padded_total != total:
        pred_flat = jnp.pad(pred_flat, (0, padded_total - total))
        true_flat = jnp.pad(true_flat, (0, padded_total - total))
    pred2d = pred_flat.reshape(rows_padded, LANES)
    true2d = true_flat.reshape(rows_padded, LANES)

    kernel = _make_focal_kernel(total, br, steps_per_core, gamma, alpha)
    in_map = lambda c, i: (c * steps_per_core + i, 0)

    partials = pl.pallas_call(
        kernel,
        out_shape=jax.ShapeDtypeStruct((NCORES * 8, LANES), jnp.float32),
        grid_spec=pltpu.PrefetchScalarGridSpec(
            num_scalar_prefetch=0,
            grid=(NCORES, steps_per_core),
            in_specs=[
                pl.BlockSpec((br, LANES), in_map),
                pl.BlockSpec((br, LANES), in_map),
            ],
            out_specs=pl.BlockSpec((8, LANES), lambda c, i: (c, 0)),
        ),
        compiler_params=pltpu.CompilerParams(
            dimension_semantics=("parallel", "arbitrary")),
    )(pred2d, true2d)

    # TODO(synk): only the 'mean' reduction (YOLOv5's BCEWithLogitsLoss default)
    # is implemented; 'sum'/'none' branches of the original module are not.
    return jnp.sum(partials, dtype=jnp.float32) / jnp.float32(total)


def _focal_loss_ref(pred, true, gamma=GAMMA, alpha=ALPHA):
    x = pred.astype(jnp.float32)
    y = true.astype(jnp.float32)
    bce = jnp.maximum(x, 0.0) - x * y + jnp.log1p(jnp.exp(-jnp.abs(x)))
    p = jax.nn.sigmoid(x)
    p_t = y * p + (1 - y) * (1 - p)
    alpha_factor = y * alpha + (1 - y) * (1 - alpha)
    mod = (1.0 - p_t) ** gamma
    return jnp.mean(bce * alpha_factor * mod)


if __name__ == "__main__":
    key = jax.random.PRNGKey(0)
    k1, k2 = jax.random.split(key)
    # NCHW inputs, consistent with a YOLOv5 objectness/cls logit map.
    pred = jax.random.normal(k1, (2, 4, 16, 16), dtype=jnp.float32)
    true = (jax.random.uniform(k2, (2, 4, 16, 16)) > 0.7).astype(jnp.float32)

    out = focal_loss(pred, true)
    out = jax.block_until_ready(out)

    ref = _focal_loss_ref(pred, true)
    assert jnp.allclose(out, ref, rtol=1e-5, atol=1e-6), (out, ref)
    print("KERNEL_OK")
</pallas_src>

<mosaic_0001>
module attributes {stable_mosaic.version = 11 : i64} {
  func.func @kernel(%arg0: i32, %arg1: i32, %arg2: memref<16x128xf32, #tpu.memory_space<vmem>>, %arg3: memref<16x128xf32, #tpu.memory_space<vmem>>, %arg4: memref<8x128xf32, #tpu.memory_space<vmem>>) attributes {dimension_semantics = [#tpu.dimension_semantics<parallel>, #tpu.dimension_semantics<arbitrary>], iteration_bounds = array<i64: 2, 1>, scalar_prefetch = 0 : i64, scratch_operands = 0 : i64, tpu.core_type = #tpu.core_type<tc>, window_params = [{transform_indices = @transform_0, window_bounds = array<i64: 16, 128>}, {transform_indices = @transform_1, window_bounds = array<i64: 16, 128>}, {transform_indices = @transform_2, window_bounds = array<i64: 8, 128>}]} {
    %c0 = arith.constant 0 : index
    %c0_0 = arith.constant 0 : index
    %0 = vector.load %arg2[%c0, %c0_0] : memref<16x128xf32, #tpu.memory_space<vmem>>, vector<16x128xf32>
    %c0_1 = arith.constant 0 : index
    %c0_2 = arith.constant 0 : index
    %1 = vector.load %arg3[%c0_1, %c0_2] : memref<16x128xf32, #tpu.memory_space<vmem>>, vector<16x128xf32>
    %2 = math.absf %0 : vector<16x128xf32>
    %cst = arith.constant 0.000000e+00 : f32
    %3 = vector.broadcast %cst : f32 to vector<16x128xf32>
    %4 = arith.subf %3, %2 : vector<16x128xf32>
    %5 = math.exp %4 : vector<16x128xf32>
    %cst_3 = arith.constant 0.000000e+00 : f32
    %6 = vector.broadcast %cst_3 : f32 to vector<16x128xf32>
    %7 = arith.maximumf %0, %6 : vector<16x128xf32>
    %8 = arith.mulf %0, %1 : vector<16x128xf32>
    %9 = arith.subf %7, %8 : vector<16x128xf32>
    %10 = math.log1p %5 : vector<16x128xf32>
    %11 = arith.addf %9, %10 : vector<16x128xf32>
    %cst_4 = arith.constant 1.000000e+00 : f32
    %12 = vector.broadcast %cst_4 : f32 to vector<16x128xf32>
    %13 = arith.addf %12, %5 : vector<16x128xf32>
    %cst_5 = arith.constant 1.000000e+00 : f32
    %14 = vector.broadcast %cst_5 : f32 to vector<16x128xf32>
    %15 = arith.divf %14, %13 : vector<16x128xf32>
    %cst_6 = arith.constant 0.000000e+00 : f32
    %16 = vector.broadcast %cst_6 : f32 to vector<16x128xf32>
    %17 = arith.cmpf oge, %0, %16 : vector<16x128xf32>
    %18 = arith.mulf %5, %15 : vector<16x128xf32>
    %19 = arith.select %17, %15, %18 : vector<16x128xi1>, vector<16x128xf32>
    %20 = arith.mulf %1, %19 : vector<16x128xf32>
    %cst_7 = arith.constant 1.000000e+00 : f32
    %21 = vector.broadcast %cst_7 : f32 to vector<16x128xf32>
    %22 = arith.subf %21, %1 : vector<16x128xf32>
    %cst_8 = arith.constant 1.000000e+00 : f32
    %23 = vector.broadcast %cst_8 : f32 to vector<16x128xf32>
    %24 = arith.subf %23, %19 : vector<16x128xf32>
    %25 = arith.mulf %22, %24 : vector<16x128xf32>
    %26 = arith.addf %20, %25 : vector<16x128xf32>
    %cst_9 = arith.constant 2.500000e-01 : f32
    %27 = vector.broadcast %cst_9 : f32 to vector<16x128xf32>
    %28 = arith.mulf %1, %27 : vector<16x128xf32>
    %cst_10 = arith.constant 1.000000e+00 : f32
    %29 = vector.broadcast %cst_10 : f32 to vector<16x128xf32>
    %30 = arith.subf %29, %1 : vector<16x128xf32>
    %cst_11 = arith.constant 7.500000e-01 : f32
    %31 = vector.broadcast %cst_11 : f32 to vector<16x128xf32>
    %32 = arith.mulf %30, %31 : vector<16x128xf32>
    %33 = arith.addf %28, %32 : vector<16x128xf32>
    %cst_12 = arith.constant 1.000000e+00 : f32
    %34 = vector.broadcast %cst_12 : f32 to vector<16x128xf32>
    %35 = arith.subf %34, %26 : vector<16x128xf32>
    %cst_13 = arith.constant 0.000000e+00 : f32
    %36 = vector.broadcast %cst_13 : f32 to vector<16x128xf32>
    %37 = arith.maximumf %35, %36 : vector<16x128xf32>
    %38 = math.sqrt %37 : vector<16x128xf32>
    %39 = arith.mulf %37, %38 : vector<16x128xf32>
    %40 = arith.mulf %11, %33 : vector<16x128xf32>
    %41 = arith.mulf %40, %39 : vector<16x128xf32>
    %c1_i32 = arith.constant 1 : i32
    %42 = arith.muli %arg0, %c1_i32 : i32
    %43 = arith.addi %42, %arg1 : i32
    %c16_i32 = arith.constant 16 : i32
    %44 = arith.muli %43, %c16_i32 : i32
    %45 = tpu.iota {dimensions = array<i32: 0>} : vector<16x128xi32>
    %46 = vector.broadcast %44 : i32 to vector<16x128xi32>
    %47 = arith.addi %45, %46 : vector<16x128xi32>
    %48 = tpu.iota {dimensions = array<i32: 1>} : vector<16x128xi32>
    %c128_i32 = arith.constant 128 : i32
    %49 = vector.broadcast %c128_i32 : i32 to vector<16x128xi32>
    %50 = arith.muli %47, %49 : vector<16x128xi32>
    %51 = arith.addi %50, %48 : vector<16x128xi32>
    %c2048_i32 = arith.constant 2048 : i32
    %52 = vector.broadcast %c2048_i32 : i32 to vector<16x128xi32>
    %53 = arith.cmpi slt, %51, %52 : vector<16x128xi32>
    %cst_14 = arith.constant 0.000000e+00 : f32
    %54 = vector.broadcast %cst_14 : f32 to vector<16x128xf32>
    %55 = arith.select %53, %41, %54 : vector<16x128xi1>, vector<16x128xf32>
    %56 = vector.shape_cast %55 : vector<16x128xf32> to vector<2x8x128xf32>
    %cst_15 = arith.constant dense<0.000000e+00> : vector<8x128xf32>
    %57 = vector.multi_reduction <add>, %56, %cst_15 [0] : vector<2x8x128xf32> to vector<8x128xf32>
    %c0_i32 = arith.constant 0 : i32
    %58 = arith.cmpi eq, %arg1, %c0_i32 : i32
    %59 = arith.extui %58 : i1 to i32
    %c0_i32_16 = arith.constant 0 : i32
    %60 = arith.cmpi ne, %59, %c0_i32_16 : i32
    scf.if %60 {
      %cst_21 = arith.constant 0.000000e+00 : f32
      %64 = vector.broadcast %cst_21 : f32 to vector<8x128xf32>
      %c0_22 = arith.constant 0 : index
      %c0_23 = arith.constant 0 : index
      %65 = vector.load %arg4[%c0_22, %c0_23] : memref<8x128xf32, #tpu.memory_space<vmem>>, vector<8x128xf32>
      tpu.vector_store %arg4[%c0_22, %c0_23], %64 {strides = array<i32>} : memref<8x128xf32, #tpu.memory_space<vmem>>, vector<8x128xf32>,
    } else {
    }
    %c0_17 = arith.constant 0 : index
    %c0_18 = arith.constant 0 : index
    %61 = vector.load %arg4[%c0_17, %c0_18] : memref<8x128xf32, #tpu.memory_space<vmem>>, vector<8x128xf32>
    %62 = arith.addf %61, %57 : vector<8x128xf32>
    %c0_19 = arith.constant 0 : index
    %c0_20 = arith.constant 0 : index
    %63 = vector.load %arg4[%c0_19, %c0_20] : memref<8x128xf32, #tpu.memory_space<vmem>>, vector<8x128xf32>
    tpu.vector_store %arg4[%c0_19, %c0_20], %62 {strides = array<i32>} : memref<8x128xf32, #tpu.memory_space<vmem>>, vector<8x128xf32>,
    return
  }
  func.func @transform_0(%arg0: i32, %arg1: i32) -> (i32, i32) {
    %c1_i32 = arith.constant 1 : i32
    %0 = arith.muli %arg0, %c1_i32 : i32
    %1 = arith.addi %0, %arg1 : i32
    %c0_i32 = arith.constant 0 : i32
    %c0_i32_0 = arith.constant 0 : i32
    return %1, %c0_i32 : i32, i32
  }
  func.func @transform_1(%arg0: i32, %arg1: i32) -> (i32, i32) {
    %c1_i32 = arith.constant 1 : i32
    %0 = arith.muli %arg0, %c1_i32 : i32
    %1 = arith.addi %0, %arg1 : i32
    %c0_i32 = arith.constant 0 : i32
    %c0_i32_0 = arith.constant 0 : i32
    return %1, %c0_i32 : i32, i32
  }
  func.func @transform_2(%arg0: i32, %arg1: i32) -> (i32, i32) {
    %c0_i32 = arith.constant 0 : i32
    %c0_i32_0 = arith.constant 0 : i32
    return %arg0, %c0_i32 : i32, i32
  }
}

</mosaic_0001>

<llo_original>
// kernel: tpu_custom_call.1
$region0: #{tpu_custom_call.1}
  #allocation0 [shape = 'u32[]', space=smem, size = 0x4, offset = 0x4, fixed_abs, tag = 'smem constant byte address 0x4 - core index']
  #allocation1 [shape = 'u32[144,128]{1,0:T(1,128)}', space=vmem, size = 0x12000, scoped, tag = 'internal scratch']
  %s0 = inlined_call_operand.hbm [shape: f32[32,128], index: 0, kind: input, shape index: {}]
  %s1 = inlined_call_operand.hbm [shape: f32[32,128], index: 1, kind: input, shape index: {}]
  %s2 = inlined_call_operand.hbm [shape: f32[16,128], index: 2, kind: output, shape index: {}]
  %s3 = sld [smem:[#allocation0]]
  $region53: #{tpu_custom_call.1} parent=0
    _
  %s5 = ssub.s32 1, %s3
  %s6 = scalar_select 0, %s5, %s3
  $region1: #{tpu_custom_call.1} parent=0
    #allocation2 [shape = 'u8[16384]{0}', space=vmem, size = 0x4000, scoped, tag = 'input window, operand 0']
    #allocation3 [shape = 's32[2]{0}', space=sflag, size = 0x8, scoped, tag = 'scoped memory for tpu_custom_call.1']
    #allocation4 [shape = 's32[2]{0}', space=sflag, size = 0x8, scoped, tag = 'scoped memory for tpu_custom_call.1']
    #allocation5 [shape = 'u8[16384]{0}', space=vmem, size = 0x4000, scoped, tag = 'input window, operand 1']
    #allocation6 [shape = 's32[2]{0}', space=sflag, size = 0x8, scoped, tag = 'scoped memory for tpu_custom_call.1']
    #allocation7 [shape = 'u8[8192]{0}', space=vmem, size = 0x2000, scoped, tag = 'output window, operand 0']
    %7 = vsyncpa [#allocation3], 0
    %s8 = scalar_lea.sflag [#allocation3], 1
    %9 = vsyncpa %s8, 0
    %10 = vsyncpa [#allocation6], 0
    %s11 = scalar_lea.sflag [#allocation6], 1
    %12 = vsyncpa %s11, 0
    %13 = vsyncpa [#allocation4], 0
    %s14 = scalar_lea.sflag [#allocation4], 1
    %15 = vsyncpa %s14, 0
    loop: start=0, step=1, limit=4
    $region2: #{tpu_custom_call.1} parent=1 // loop_pre_header
      _
    $region3: #{tpu_custom_call.1} parent=1 // loop_header
      %s17 = sphi 0, %s21
      %p18 = scmp.ge.s32.totalorder %s17, 4
      %s24 = sphi 0, %s36
      %s25 = sphi 0, %s32
      %s26 = sphi 0, %s24
      %s27 = sphi 0, %s25
      %s28 = sphi 0, %s26
      %s29 = sphi 0, %s27
      %s41 = sphi 0, %s43
      %s44 = sphi 0, %s41
      %s45 = sphi 0, %s44
      %s61 = sphi 0, %s45
      %s69 = sphi 0, %s71
      %s72 = sphi 0, %s69
      %s73 = sphi 0, %s72
      %s89 = sphi 0, %s73
      %s95 = sphi 0, %s97
      %s98 = sphi 0, %s95
      %s99 = sphi 0, %s98
      %s115 = sphi 0, %s99
    $region4: #{tpu_custom_call.1} parent=1 // loop_header_branch
      %20 = sbr.rel (%p18) target = $region8
    $region5: #{tpu_custom_call.1} parent=1 // loop_body
      %s22 = ssub.s32 %s17, 1
      %s23 = ssub.s32 %s17, 2
      %s30 = sadd.s32 1, %s25
      %p31 = scmp.ge.s32.totalorder %s30, 1
      %s32 = scalar_select %p31, 0, %s30
      %s33 = sadd.s32 1, %s24
      %s34 = scalar_select %p31, %s33, %s24
      %p35 = scmp.ge.s32.totalorder %s34, 2
      %s36 = scalar_select %p35, 0, %s34
      %s37 = sadd.s32 %s24, %s25
      %s38 = sadd.s32 %s36, %s32
      %s39 = ssub.s32 %s37, %s38
      %p40 = scmp.eq.s32.totalorder %s39, 0
      %s42 = sadd.s32 %s41, 1
      %s43 = scalar_select %p40, %s41, %s42
      %p46 = pneg %p40
      %p47 = scmp.eq.s32.totalorder %s17, 1
      %p48 = por %p46, %p47
      %p49 = scmp.ne.s32.totalorder %s41, %s44
      %p50 = scmp.eq.s32.totalorder %s17, 0
      %p51 = por %p49, %p50
      %p52 = scmp.ne.s32.totalorder %s41, %s44
      %p53 = scmp.eq.s32.totalorder %s22, 1
      %p54 = por %p52, %p53
      %p55 = scmp.ne.s32.totalorder %s44, %s45
      %p56 = scmp.eq.s32.totalorder %s22, 0
      %p57 = por %p55, %p56
      %p58 = scmp.ne.s32.totalorder %s44, %s45
      %p59 = scmp.eq.s32.totalorder %s23, 1
      %p60 = por %p58, %p59
      %p62 = scmp.ne.s32.totalorder %s45, %s61
      %p63 = scmp.eq.s32.totalorder %s23, 0
      %p64 = por %p62, %p63
      %s65 = sadd.s32 %s24, %s25
      %s66 = sadd.s32 %s36, %s32
      %s67 = ssub.s32 %s65, %s66
      %p68 = scmp.eq.s32.totalorder %s67, 0
      %s70 = sadd.s32 %s69, 1
      %s71 = scalar_select %p68, %s69, %s70
      %p74 = pneg %p68
      %p75 = scmp.eq.s32.totalorder %s17, 1
      %p76 = por %p74, %p75
      %p77 = scmp.ne.s32.totalorder %s69, %s72
      %p78 = scmp.eq.s32.totalorder %s17, 0
      %p79 = por %p77, %p78
      %p80 = scmp.ne.s32.totalorder %s69, %s72
      %p81 = scmp.eq.s32.totalorder %s22, 1
      %p82 = por %p80, %p81
      %p83 = scmp.ne.s32.totalorder %s72, %s73
      %p84 = scmp.eq.s32.totalorder %s22, 0
      %p85 = por %p83, %p84
      %p86 = scmp.ne.s32.totalorder %s72, %s73
      %p87 = scmp.eq.s32.totalorder %s23, 1
      %p88 = por %p86, %p87
      %p90 = scmp.ne.s32.totalorder %s73, %s89
      %p91 = scmp.eq.s32.totalorder %s23, 0
      %p92 = por %p90, %p91
      %s93 = ssub.s32 %s24, %s36
      %p94 = scmp.eq.s32.totalorder %s93, 0
      %s96 = sadd.s32 %s95, 1
      %s97 = scalar_select %p94, %s95, %s96
      %p100 = pneg %p94
      %p101 = scmp.eq.s32.totalorder %s17, 1
      %p102 = por %p100, %p101
      %p103 = scmp.ne.s32.totalorder %s95, %s98
      %p104 = scmp.eq.s32.totalorder %s17, 0
      %p105 = por %p103, %p104
      %p106 = scmp.ne.s32.totalorder %s95, %s98
      %p107 = scmp.eq.s32.totalorder %s22, 1
      %p108 = por %p106, %p107
      %p109 = scmp.ne.s32.totalorder %s98, %s99
      %p110 = scmp.eq.s32.totalorder %s22, 0
      %p111 = por %p109, %p110
      %p112 = scmp.ne.s32.totalorder %s98, %s99
      %p113 = scmp.eq.s32.totalorder %s23, 1
      %p114 = por %p112, %p113
      %p116 = scmp.ne.s32.totalorder %s99, %s115
      %p117 = scmp.eq.s32.totalorder %s23, 0
      %p118 = por %p116, %p117
      %p119 = scmp.le.s32.totalorder 1, %s17
      %p120 = scmp.lt.s32.totalorder %s17, 3
      %p121 = pnand %p119, %p120
      %p122 = pneg %p121
      // Predicated region
      $region9: #{tpu_custom_call.1} parent=5 // pred_check
        _
      $region10: #{tpu_custom_call.1} parent=5 // pred_check_branch
        %124 = sbr.rel (%p121) target = $region12
      $region11: #{tpu_custom_call.1} parent=5 // pred_region
        %s125 = ssub.s32 %s17, 1
      $region12: #{tpu_custom_call.1} parent=5 // pred_fallthru
        _
      %p126 = scmp.lt.s32.totalorder %s17, 2
      // Predicated region
      $region13: #{tpu_custom_call.1} parent=5 // pred_check
        %p127 = pneg %p126
      $region14: #{tpu_custom_call.1} parent=5 // pred_check_branch
        %129 = sbr.rel (%p127) target = $region16
      $region15: #{tpu_custom_call.1} parent=5 // pred_region
        // Predicated region
        $region17: #{tpu_custom_call.1} parent=15 // pred_check
          %p130 = pneg %p51
        $region18: #{tpu_custom_call.1} parent=15 // pred_check_branch
          %132 = sbr.rel (%p130) target = $region20
        $region19: #{tpu_custom_call.1} parent=15 // pred_region
          %s133 = sand.u32 %s41, 1
          %s134 = scalar_lea.sflag [#allocation3], %s133
          %s135 = sand.u32 %s41, 1
          %s136 = smul.addr %s135, 16
          %s137 = scalar_lea.vmem [#allocation2], %s136
          %s138 = sadd.s32 %s24, %s25
          %s139 = smul.u32 2, %s138
          %s141 = ssub.s32 256, 256
          %142 = vsyncadd %s134, %s141
          %s143 = smul.addr %s139, 128
          %s144 = scalar_lea.hbm %s0, %s143
          %s145 = sshll.u32 %s137, 4
          %s146 = int_to_ptr.vmem [resolvable:$true] %s145
          %151 = dma.hbm_to_vmem [thread:$0]  %s144, 256, %s146, %s134, 128, 128, 8
        $region20: #{tpu_custom_call.1} parent=15 // pred_fallthru
          _
        // Predicated region
        $region21: #{tpu_custom_call.1} parent=15 // pred_check
          %p152 = pneg %p79
        $region22: #{tpu_custom_call.1} parent=15 // pred_check_branch
          %154 = sbr.rel (%p152) target = $region24
        $region23: #{tpu_custom_call.1} parent=15 // pred_region
          %s155 = sand.u32 %s69, 1
          %s156 = scalar_lea.sflag [#allocation6], %s155
          %s157 = sand.u32 %s69, 1
          %s158 = smul.addr %s157, 16
          %s159 = scalar_lea.vmem [#allocation5], %s158
          %s160 = sadd.s32 %s24, %s25
          %s161 = smul.u32 2, %s160
          %s163 = ssub.s32 256, 256
          %164 = vsyncadd %s156, %s163
          %s165 = smul.addr %s161, 128
          %s166 = scalar_lea.hbm %s1, %s165
          %s167 = sshll.u32 %s159, 4
          %s168 = int_to_ptr.vmem [resolvable:$true] %s167
          %173 = dma.hbm_to_vmem [thread:$0]  %s166, 256, %s168, %s156, 128, 128, 8
        $region24: #{tpu_custom_call.1} parent=15 // pred_fallthru
          _
      $region16: #{tpu_custom_call.1} parent=5 // pred_fallthru
        _
      %p174 = scmp.le.s32.totalorder 1, %s17
      %p175 = scmp.lt.s32.totalorder %s17, 3
      %p176 = pnand %p174, %p175
      %p177 = pneg %p176
      // Predicated region
      $region25: #{tpu_custom_call.1} parent=5 // pred_check
        _
      $region26: #{tpu_custom_call.1} parent=5 // pred_check_branch
        %179 = sbr.rel (%p176) target = $region28
      $region27: #{tpu_custom_call.1} parent=5 // pred_region
        %s180 = ssub.s32 %s17, 1
        %s181 = sand.u32 %s44, 1
        %s182 = scalar_lea.sflag [#allocation3], %s181
        %s183 = sand.u32 %s44, 1
        %s184 = smul.addr %s183, 16
        %s185 = scalar_lea.vmem [#allocation2], %s184
        // Predicated region
        $region29: #{tpu_custom_call.1} parent=27 // pred_check
          %p186 = pneg %p57
        $region30: #{tpu_custom_call.1} parent=27 // pred_check_branch
          %188 = sbr.rel (%p186) target = $region32
        $region31: #{tpu_custom_call.1} parent=27 // pred_region
          %189 = dma.done %s182, 256
        $region32: #{tpu_custom_call.1} parent=27 // pred_fallthru
          _
        %s190 = sand.u32 %s72, 1
        %s191 = scalar_lea.sflag [#allocation6], %s190
        %s192 = sand.u32 %s72, 1
        %s193 = smul.addr %s192, 16
        %s194 = scalar_lea.vmem [#allocation5], %s193
        // Predicated region
        $region33: #{tpu_custom_call.1} parent=27 // pred_check
          %p195 = pneg %p85
        $region34: #{tpu_custom_call.1} parent=27 // pred_check_branch
          %197 = sbr.rel (%p195) target = $region36
        $region35: #{tpu_custom_call.1} parent=27 // pred_region
          %198 = dma.done %s191, 256
        $region36: #{tpu_custom_call.1} parent=27 // pred_fallthru
          _
        %s199 = sand.u32 %s44, 1
        %s200 = scalar_lea.sflag [#allocation3], %s199
        %s201 = sand.u32 %s44, 1
        %s202 = smul.addr %s201, 16
        %s203 = scalar_lea.vmem [#allocation2], %s202
        %p204 = pneg %p57
        %p205 = pneg %p54
        %s206 = sand.u32 %s72, 1
        %s207 = scalar_lea.sflag [#allocation6], %s206
        %s208 = sand.u32 %s72, 1
        %s209 = smul.addr %s208, 16
        %s210 = scalar_lea.vmem [#allocation5], %s209
        %p211 = pneg %p85
        %p212 = pneg %p82
        %p213 = pneg %p111
        %p214 = pneg %p108
        %s215 = sand.u32 %s98, 1
        %s216 = scalar_lea.sflag [#allocation4], %s215
        %s217 = sand.u32 %s98, 1
        %s218 = smul.addr %s217, 8
        %s219 = scalar_lea.vmem [#allocation7], %s218
        %s220 = sadd.s32 %s26, %s27
        %s221 = smul.u32 2, %s220
        %s222 = sadd.s32 %s26, %s27
        %s223 = smul.u32 2, %s222
        %v224 = vld [vmem:[%s185] sm:$0xff]
        %v225 = vld [vmem:[%s185 + $0x8] sm:$0xff]
        %v226 = vld [vmem:[%s194] sm:$0xff]
        %v227 = vld [vmem:[%s194 + $0x8] sm:$0xff]
        %v228 = vand.u32 2147483647, %v224
        %v229 = vand.u32 2147483647, %v225
        %v230 = vsub.f32 0.0, %v228
        %v231 = vsub.f32 0.0, %v229
        %v232 = vmul.f32 %v230, 1.442695
        %v233 = vpow.pop %v232
        %v234 = vmul.f32 %v231, 1.442695
        %v235 = vpow.pop %v234
        %v236 = vmax.f32 %v224, 0.0
        %v237 = vmax.f32 %v225, 0.0
        %v238 = vmul.f32 %v224, %v226
        %v239 = vmul.f32 %v225, %v227
        %v240 = vsub.f32 %v236, %v238
        %v241 = vsub.f32 %v237, %v239
        %v242 = vadd.f32 %v233, 1.0
        %v243 = vlog2.pop %v242
        %v244 = vmul.f32 %v243, 0.6931472
        %v245 = vmul.f32 -0.5, %v233
        %v246 = vadd.f32 %v245, 1.0
        %v247 = vmul.f32 %v246, %v233
        %v248 = vand.u32 2147483647, %v233
        %vm249 = vcmp.lt.f32.partialorder %v248, 0.0004427343
        %v250 = vsel %vm249, %v247, %v244
        %v251 = vadd.f32 %v235, 1.0
        %v252 = vlog2.pop %v251
        %v253 = vmul.f32 %v252, 0.6931472
        %v254 = vmul.f32 -0.5, %v235
        %v255 = vadd.f32 %v254, 1.0
        %v256 = vmul.f32 %v255, %v235
        %v257 = vand.u32 2147483647, %v235
        %vm258 = vcmp.lt.f32.partialorder %v257, 0.0004427343
        %v259 = vsel %vm258, %v256, %v253
        %v260 = vadd.f32 %v240, %v250
        %v261 = vadd.f32 %v241, %v259
        %v262 = vadd.f32 %v233, 1.0
        %v263 = vadd.f32 %v235, 1.0
        %v264 = vrcp.pop %v262
        %v265 = vmul.f32 1.0, %v264
        %v266 = vrcp.pop %v263
        %v267 = vmul.f32 1.0, %v266
        %vm268 = vcmp.ge.f32.partialorder %v224, 0.0
        %vm269 = vcmp.ge.f32.partialorder %v225, 0.0
        %v270 = vmul.f32 %v233, %v265
        %v271 = vmul.f32 %v235, %v267
        %v272 = vsel %vm268, %v265, %v270
        %v273 = vsel %vm269, %v267, %v271
        %v274 = vmul.f32 %v226, %v272
        %v275 = vmul.f32 %v227, %v273
        %v276 = vsub.f32 1.0, %v226
        %v277 = vsub.f32 1.0, %v227
        %v278 = vsub.f32 1.0, %v272
        %v279 = vsub.f32 1.0, %v273
        %v280 = vmul.f32 %v276, %v278
        %v281 = vmul.f32 %v277, %v279
        %v282 = vadd.f32 %v274, %v280
        %v283 = vadd.f32 %v275, %v281
        %v284 = vmul.f32 %v226, 0.25
        %v285 = vmul.f32 %v227, 0.25
        %v286 = vmul.f32 %v276, 0.75
        %v287 = vmul.f32 %v277, 0.75
        %v288 = vadd.f32 %v284, %v286
        %v289 = vadd.f32 %v285, %v287
        %v290 = vsub.f32 1.0, %v282
        %v291 = vsub.f32 1.0, %v283
        %v292 = vmax.f32 %v290, 0.0
        %v293 = vmax.f32 %v291, 0.0
        %v294 = vrsqrt.pop %v292
        %v295 = vmul.f32 %v292, %v294
        %vm296 = vcmp.eq.f32.partialorder %v292, inf
        %v297 = vsel %vm296, %v292, %v295
        %vm298 = vcmp.eq.f32.partialorder %v292, 0.0
        %v299 = vand.u32 %v292, 2147483648
        %v300 = vsel %vm298, %v299, %v297
        %v301 = vrsqrt.pop %v293
        %v302 = vmul.f32 %v293, %v301
        %vm303 = vcmp.eq.f32.partialorder %v293, inf
        %v304 = vsel %vm303, %v293, %v302
        %vm305 = vcmp.eq.f32.partialorder %v293, 0.0
        %v306 = vand.u32 %v293, 2147483648
        %v307 = vsel %vm305, %v306, %v304
        %v308 = vmul.f32 %v292, %v300
        %v309 = vmul.f32 %v293, %v307
        %v310 = vmul.f32 %v260, %v288
        %v311 = vmul.f32 %v261, %v289
        %v312 = vmul.f32 %v310, %v308
        %v313 = vmul.f32 %v311, %v309
        %s314 = sadd.s32 %s26, %s27
        %s315 = smul.u32 %s314, 16
        %v316 = vlaneseq
        %v317 = vshrl.u32 %v316, 7
        %v318 = vadd.s32 %v317, 8
        %v319 = vstv %s315
        %v320 = vadd.s32 %v317, %v319
        %v321 = vadd.s32 %v318, %v319
        %v322 = vlaneseq
        %v323 = vand.u32 %v322, 127
        %v324 = vmul.u32 %v320, 128
        %v325 = vmul.u32 %v321, 128
        %v326 = vadd.s32 %v324, %v323
        %v327 = vadd.s32 %v325, %v323
        %vm328 = vcmp.lt.s32.totalorder %v326, 2048
        %vm329 = vcmp.lt.s32.totalorder %v327, 2048
        %v330 = vsel %vm328, %v312, 0.0
        %v331 = vsel %vm329, %v313, 0.0
        %v332 = vadd.f32 %v330, %v331
        %p333 = scmp.eq.s32.totalorder %s27, 0
        // Predicated region
        $region37: #{tpu_custom_call.1} parent=27 // pred_check
          %p334 = pneg %p333
        $region38: #{tpu_custom_call.1} parent=27 // pred_check_branch
          %336 = sbr.rel (%p334) target = $region40
        $region39: #{tpu_custom_call.1} parent=27 // pred_region
          %337 = vst [vmem:[%s219] sm:$0xff] 0.0
        $region40: #{tpu_custom_call.1} parent=27 // pred_fallthru
          _
        %v338 = vld [vmem:[%s219] sm:$0xff]
        %v339 = vadd.f32 %v338, %v332
        %340 = vst [vmem:[%s219] sm:$0xff] %v339
        %s341 = sand.u32 %s98, 1
        %s342 = scalar_lea.sflag [#allocation4], %s341
        %s343 = sand.u32 %s98, 1
        %s344 = smul.addr %s343, 8
        %s345 = scalar_lea.vmem [#allocation7], %s344
        // Predicated region
        $region41: #{tpu_custom_call.1} parent=27 // pred_check
          %p346 = pneg %p108
        $region42: #{tpu_custom_call.1} parent=27 // pred_check_branch
          %348 = sbr.rel (%p346) target = $region44
        $region43: #{tpu_custom_call.1} parent=27 // pred_region
          %s350 = ssub.s32 128, 128
          %351 = vsyncadd %s342, %s350
          %s352 = smul.addr %s26, 128
          %s353 = scalar_lea.hbm %s2, %s352
          %s355 = sshll.u32 %s345, 4
          %s356 = int_to_ptr.vmem [resolvable:$true] %s355
          %358 = dma.vmem_to_hbm [thread:$0]  %s356, 128, %s353, %s342
        $region44: #{tpu_custom_call.1} parent=27 // pred_fallthru
          _
      $region28: #{tpu_custom_call.1} parent=5 // pred_fallthru
        _
      %p359 = scmp.le.s32.totalorder 2, %s17
      // Predicated region
      $region45: #{tpu_custom_call.1} parent=5 // pred_check
        %p360 = pneg %p359
      $region46: #{tpu_custom_call.1} parent=5 // pred_check_branch
        %362 = sbr.rel (%p360) target = $region48
      $region47: #{tpu_custom_call.1} parent=5 // pred_region
        %s363 = ssub.s32 %s17, 2
        // Predicated region
        $region49: #{tpu_custom_call.1} parent=47 // pred_check
          %p364 = pneg %p114
        $region50: #{tpu_custom_call.1} parent=47 // pred_check_branch
          %366 = sbr.rel (%p364) target = $region52
        $region51: #{tpu_custom_call.1} parent=47 // pred_region
          %s367 = sand.u32 %s99, 1
          %s368 = scalar_lea.sflag [#allocation4], %s367
          %s369 = sand.u32 %s99, 1
          %s370 = smul.addr %s369, 8
          %s371 = scalar_lea.vmem [#allocation7], %s370
          %372 = dma.done %s368, 128
        $region52: #{tpu_custom_call.1} parent=47 // pred_fallthru
          _
      $region48: #{tpu_custom_call.1} parent=5 // pred_fallthru
        _
    $region6: #{tpu_custom_call.1} parent=1 // loop_footer
      %s21 = sadd.s32 1, %s17
    $region7: #{tpu_custom_call.1} parent=1 // loop_footer_branch
      %16 = sbr.rel target = $region3
    $region8: #{tpu_custom_call.1} parent=1 // loop_exit
      _
    %373 = vsyncpa [#allocation3], 1
    %s374 = scalar_lea.sflag [#allocation3], 1
    %375 = vsyncpa %s374, 1
    %376 = vsyncpa [#allocation6], 1
    %s377 = scalar_lea.sflag [#allocation6], 1
    %378 = vsyncpa %s377, 1
    %379 = vsyncpa [#allocation4], 1
    %s380 = scalar_lea.sflag [#allocation4], 1
    %381 = vsyncpa %s380, 1

</llo_original>
